<compile_context>
chip_gen: v7x
topology: tpu7x:2x2x1
jax: 0.10.0
libtpu: 0.0.40
codegen_flags: <defaults>
</compile_context>

<pallas_src>
import functools

import jax
import jax.numpy as jnp
from jax import lax
from jax.experimental import pallas as pl
from jax.experimental.pallas import tpu as pltpu


def _round_up(x, m):
    return (x + m - 1) // m * m


def _contrastive_loss_kernel(x1_ref, x2_ref, lbl_ref, out_ref,
                             s11_ref, s12_ref, s22_ref,
                             *, margin, batch, feat, tb, td):
    i = pl.program_id(0)          # batch-tile index (parallel across cores)
    j = pl.program_id(1)          # feature-tile index (reduction, last axis)
    nj = pl.num_programs(1)

    x1 = x1_ref[...].astype(jnp.float32)
    x2 = x2_ref[...].astype(jnp.float32)

    # Mask out-of-bounds feature lanes of the (possibly partial) last tile.
    # Only traced when D is not a multiple of td (static check).
    if feat % td != 0:
        col = j * td + lax.broadcasted_iota(jnp.int32, (tb, td), 1)
        valid = col < feat
        x1 = jnp.where(valid, x1, 0.0)
        x2 = jnp.where(valid, x2, 0.0)

    # Per-128-lane partial sums: pure VPU adds over vreg-aligned lane chunks.
    # The single cross-lane (XLU) reduce is deferred to the finalize step.
    a = x1[:, 0:128]
    b = x2[:, 0:128]
    p11 = a * a
    p12 = a * b
    p22 = b * b
    for c in range(1, td // 128):
        a = x1[:, c * 128:(c + 1) * 128]
        b = x2[:, c * 128:(c + 1) * 128]
        p11 = p11 + a * a
        p12 = p12 + a * b
        p22 = p22 + b * b

    @pl.when(j == 0)
    def _():
        s11_ref[...] = p11
        s12_ref[...] = p12
        s22_ref[...] = p22

    @pl.when(j != 0)
    def _():
        s11_ref[...] += p11
        s12_ref[...] += p12
        s22_ref[...] += p22

    @pl.when(j == nj - 1)
    def _():
        s11 = jnp.sum(s11_ref[...], axis=-1, keepdims=True)   # (tb, 1)
        s12 = jnp.sum(s12_ref[...], axis=-1, keepdims=True)
        s22 = jnp.sum(s22_ref[...], axis=-1, keepdims=True)

        # F.normalize (eps=1e-12) followed by F.cosine_similarity on the
        # resulting unit vectors == <x1,x2> / max(||x1||*||x2||, eps).
        norm_prod = jnp.sqrt(s11) * jnp.sqrt(s22)
        cos = s12 / jnp.maximum(norm_prod, 1e-12)

        lbl = lbl_ref[...].astype(jnp.float32)
        hinge = jnp.maximum(margin - cos, 0.0)
        per_row = (1.0 - lbl) * cos * cos + lbl * hinge * hinge

        # Mask rows that are batch padding (partial last batch tile).
        if batch % tb != 0:
            row = i * tb + lax.broadcasted_iota(jnp.int32, per_row.shape, 0)
            per_row = jnp.where(row < batch, per_row, 0.0)

        out_ref[...] = jnp.sum(per_row, keepdims=True)         # (1, 1) partial


def contrastive_loss(output1, output2, label, *, margin=1.0,
                     block_b=256, block_d=2048):
    """Scalar contrastive loss matching the PyTorch module's forward."""
    B, D = output1.shape
    assert output2.shape == (B, D)

    itemsize = jnp.dtype(output1.dtype).itemsize
    sublane = max(8, 32 // max(itemsize, 1))      # 8 f32, 16 bf16, 32 i8/fp8
    tb = min(_round_up(B, sublane), block_b)      # sublane-aligned batch tile
    td = min(_round_up(D, 128), block_d)          # lane-aligned feature tile
    nb = pl.cdiv(B, tb)
    nd = pl.cdiv(D, td)

    lbl = jnp.reshape(label, (B, 1)).astype(jnp.float32)

    kernel = functools.partial(_contrastive_loss_kernel,
                               margin=float(margin), batch=B, feat=D,
                               tb=tb, td=td)

    # Advisory cost for XLA scheduling around the custom call.
    cost = pl.CostEstimate(
        flops=6 * B * D,
        transcendentals=2 * B,
        bytes_accessed=2 * B * D * itemsize + B * 4 + nb * 4)

    # Explicit VMEM budget: 2 operands x 2 buffers x tile + label + accumulators.
    vmem_need = (2 * 2 * tb * td * itemsize
                 + 2 * tb * 4
                 + 3 * tb * 128 * 4
                 + 2 * 128 * 4)
    vmem_limit = int(min(max(2 * vmem_need + (4 << 20), 16 << 20), 48 << 20))

    partials = pl.pallas_call(
        kernel,
        out_shape=jax.ShapeDtypeStruct((nb, 1, 1), jnp.float32),
        grid_spec=pltpu.PrefetchScalarGridSpec(
            num_scalar_prefetch=0,
            grid=(nb, nd),
            in_specs=[
                pl.BlockSpec((tb, td), lambda i, j: (i, j)),
                pl.BlockSpec((tb, td), lambda i, j: (i, j)),
                pl.BlockSpec((tb, 1), lambda i, j: (i, 0)),
            ],
            # One (1,1) partial per batch tile -> no cross-core accumulator race.
            out_specs=pl.BlockSpec((None, 1, 1), lambda i, j: (i, 0, 0)),
            scratch_shapes=[pltpu.VMEM((tb, 128), jnp.float32),
                            pltpu.VMEM((tb, 128), jnp.float32),
                            pltpu.VMEM((tb, 128), jnp.float32)],
        ),
        compiler_params=pltpu.CompilerParams(
            dimension_semantics=("parallel", "arbitrary"),
            vmem_limit_bytes=vmem_limit),
        cost_estimate=cost,
    )(output1, output2, lbl)

    # Sum per-tile partials, then divide once (matches torch.mean rounding).
    return jnp.sum(partials) / B


def _reference_loss(o1, o2, lbl, margin=1.0):
    n1 = o1 / jnp.maximum(jnp.linalg.norm(o1, axis=1, keepdims=True), 1e-12)
    n2 = o2 / jnp.maximum(jnp.linalg.norm(o2, axis=1, keepdims=True), 1e-12)
    cos = jnp.sum(n1 * n2, axis=1)
    hinge = jnp.maximum(margin - cos, 0.0)
    return jnp.mean((1.0 - lbl) * cos * cos + lbl * hinge * hinge)


if __name__ == "__main__":
    key = jax.random.PRNGKey(0)
    k1, k2, k3 = jax.random.split(key, 3)

    # Aligned case: small embedding pair + binary labels.
    B, D = 4, 512
    out1 = jax.random.normal(k1, (B, D), jnp.float32)
    out2 = jax.random.normal(k2, (B, D), jnp.float32)
    label = jax.random.bernoulli(k3, 0.5, (B,)).astype(jnp.float32)

    loss = jax.jit(contrastive_loss)(out1, out2, label)
    jax.block_until_ready(loss)
    expected = _reference_loss(out1, out2, label)
    assert loss.shape == ()
    assert bool(jnp.isfinite(loss))
    assert abs(float(loss) - float(expected)) < 5e-5, (float(loss), float(expected))

    # Unaligned case: exercises the in-kernel lane/row masking (no jnp.pad).
    B2, D2 = 6, 300
    o1b = jax.random.normal(k1, (B2, D2), jnp.float32)
    o2b = jax.random.normal(k2, (B2, D2), jnp.float32)
    lblb = jax.random.bernoulli(k3, 0.5, (B2,)).astype(jnp.float32)
    loss2 = jax.jit(contrastive_loss)(o1b, o2b, lblb)
    jax.block_until_ready(loss2)
    expected2 = _reference_loss(o1b, o2b, lblb)
    assert abs(float(loss2) - float(expected2)) < 5e-5, (float(loss2), float(expected2))

    print("KERNEL_OK")
</pallas_src>

<mosaic_0001>
module attributes {stable_mosaic.version = 11 : i64} {
  func.func @_contrastive_loss_kernel(%arg0: i32, %arg1: i32, %arg2: memref<8x512xf32, #tpu.memory_space<vmem>>, %arg3: memref<8x512xf32, #tpu.memory_space<vmem>>, %arg4: memref<8x1xf32, #tpu.memory_space<vmem>>, %arg5: memref<1x1x1xf32, #tpu.memory_space<vmem>>, %arg6: memref<8x128xf32, #tpu.memory_space<vmem>>, %arg7: memref<8x128xf32, #tpu.memory_space<vmem>>, %arg8: memref<8x128xf32, #tpu.memory_space<vmem>>) attributes {dimension_semantics = [#tpu.dimension_semantics<parallel>, #tpu.dimension_semantics<arbitrary>], iteration_bounds = array<i64: 1, 1>, scalar_prefetch = 0 : i64, scratch_operands = 3 : i64, tpu.core_type = #tpu.core_type<tc>, window_params = [{transform_indices = @transform_0, window_bounds = array<i64: 8, 512>}, {transform_indices = @transform_1, window_bounds = array<i64: 8, 512>}, {transform_indices = @transform_2, window_bounds = array<i64: 8, 1>}, {transform_indices = @transform_3, window_bounds = array<i64: 1, 1, 1>}]} {
    %c0 = arith.constant 0 : index
    %c0_0 = arith.constant 0 : index
    %0 = vector.load %arg2[%c0, %c0_0] : memref<8x512xf32, #tpu.memory_space<vmem>>, vector<8x512xf32>
    %c0_1 = arith.constant 0 : index
    %c0_2 = arith.constant 0 : index
    %1 = vector.load %arg3[%c0_1, %c0_2] : memref<8x512xf32, #tpu.memory_space<vmem>>, vector<8x512xf32>
    %2 = vector.extract_strided_slice %0 {offsets = [0, 0], sizes = [8, 128], strides = [1, 1]} : vector<8x512xf32> to vector<8x128xf32>
    %3 = vector.extract_strided_slice %1 {offsets = [0, 0], sizes = [8, 128], strides = [1, 1]} : vector<8x512xf32> to vector<8x128xf32>
    %4 = arith.mulf %2, %2 : vector<8x128xf32>
    %5 = arith.mulf %2, %3 : vector<8x128xf32>
    %6 = arith.mulf %3, %3 : vector<8x128xf32>
    %7 = vector.extract_strided_slice %0 {offsets = [0, 128], sizes = [8, 128], strides = [1, 1]} : vector<8x512xf32> to vector<8x128xf32>
    %8 = vector.extract_strided_slice %1 {offsets = [0, 128], sizes = [8, 128], strides = [1, 1]} : vector<8x512xf32> to vector<8x128xf32>
    %9 = arith.mulf %7, %7 : vector<8x128xf32>
    %10 = arith.addf %4, %9 : vector<8x128xf32>
    %11 = arith.mulf %7, %8 : vector<8x128xf32>
    %12 = arith.addf %5, %11 : vector<8x128xf32>
    %13 = arith.mulf %8, %8 : vector<8x128xf32>
    %14 = arith.addf %6, %13 : vector<8x128xf32>
    %15 = vector.extract_strided_slice %0 {offsets = [0, 256], sizes = [8, 128], strides = [1, 1]} : vector<8x512xf32> to vector<8x128xf32>
    %16 = vector.extract_strided_slice %1 {offsets = [0, 256], sizes = [8, 128], strides = [1, 1]} : vector<8x512xf32> to vector<8x128xf32>
    %17 = arith.mulf %15, %15 : vector<8x128xf32>
    %18 = arith.addf %10, %17 : vector<8x128xf32>
    %19 = arith.mulf %15, %16 : vector<8x128xf32>
    %20 = arith.addf %12, %19 : vector<8x128xf32>
    %21 = arith.mulf %16, %16 : vector<8x128xf32>
    %22 = arith.addf %14, %21 : vector<8x128xf32>
    %23 = vector.extract_strided_slice %0 {offsets = [0, 384], sizes = [8, 128], strides = [1, 1]} : vector<8x512xf32> to vector<8x128xf32>
    %24 = vector.extract_strided_slice %1 {offsets = [0, 384], sizes = [8, 128], strides = [1, 1]} : vector<8x512xf32> to vector<8x128xf32>
    %25 = arith.mulf %23, %23 : vector<8x128xf32>
    %26 = arith.addf %18, %25 : vector<8x128xf32>
    %27 = arith.mulf %23, %24 : vector<8x128xf32>
    %28 = arith.addf %20, %27 : vector<8x128xf32>
    %29 = arith.mulf %24, %24 : vector<8x128xf32>
    %30 = arith.addf %22, %29 : vector<8x128xf32>
    %c0_i32 = arith.constant 0 : i32
    %31 = arith.cmpi eq, %arg1, %c0_i32 : i32
    %32 = arith.extui %31 : i1 to i32
    %c0_i32_3 = arith.constant 0 : i32
    %33 = arith.cmpi ne, %32, %c0_i32_3 : i32
    scf.if %33 {
      %c0_8 = arith.constant 0 : index
      %c0_9 = arith.constant 0 : index
      %40 = vector.load %arg6[%c0_8, %c0_9] : memref<8x128xf32, #tpu.memory_space<vmem>>, vector<8x128xf32>
      tpu.vector_store %arg6[%c0_8, %c0_9], %26 {strides = array<i32>} : memref<8x128xf32, #tpu.memory_space<vmem>>, vector<8x128xf32>,
      %c0_10 = arith.constant 0 : index
      %c0_11 = arith.constant 0 : index
      %41 = vector.load %arg7[%c0_10, %c0_11] : memref<8x128xf32, #tpu.memory_space<vmem>>, vector<8x128xf32>
      tpu.vector_store %arg7[%c0_10, %c0_11], %28 {strides = array<i32>} : memref<8x128xf32, #tpu.memory_space<vmem>>, vector<8x128xf32>,
      %c0_12 = arith.constant 0 : index
      %c0_13 = arith.constant 0 : index
      %42 = vector.load %arg8[%c0_12, %c0_13] : memref<8x128xf32, #tpu.memory_space<vmem>>, vector<8x128xf32>
      tpu.vector_store %arg8[%c0_12, %c0_13], %30 {strides = array<i32>} : memref<8x128xf32, #tpu.memory_space<vmem>>, vector<8x128xf32>,
    } else {
    }
    %c0_i32_4 = arith.constant 0 : i32
    %34 = arith.cmpi ne, %arg1, %c0_i32_4 : i32
    %35 = arith.extui %34 : i1 to i32
    %c0_i32_5 = arith.constant 0 : i32
    %36 = arith.cmpi ne, %35, %c0_i32_5 : i32
    scf.if %36 {
      %c0_8 = arith.constant 0 : index
      %c0_9 = arith.constant 0 : index
      %40 = vector.load %arg6[%c0_8, %c0_9] : memref<8x128xf32, #tpu.memory_space<vmem>>, vector<8x128xf32>
      %41 = arith.addf %40, %26 : vector<8x128xf32>
      %c0_10 = arith.constant 0 : index
      %c0_11 = arith.constant 0 : index
      %42 = vector.load %arg6[%c0_10, %c0_11] : memref<8x128xf32, #tpu.memory_space<vmem>>, vector<8x128xf32>
      tpu.vector_store %arg6[%c0_10, %c0_11], %41 {strides = array<i32>} : memref<8x128xf32, #tpu.memory_space<vmem>>, vector<8x128xf32>,
      %c0_12 = arith.constant 0 : index
      %c0_13 = arith.constant 0 : index
      %43 = vector.load %arg7[%c0_12, %c0_13] : memref<8x128xf32, #tpu.memory_space<vmem>>, vector<8x128xf32>
      %44 = arith.addf %43, %28 : vector<8x128xf32>
      %c0_14 = arith.constant 0 : index
      %c0_15 = arith.constant 0 : index
      %45 = vector.load %arg7[%c0_14, %c0_15] : memref<8x128xf32, #tpu.memory_space<vmem>>, vector<8x128xf32>
      tpu.vector_store %arg7[%c0_14, %c0_15], %44 {strides = array<i32>} : memref<8x128xf32, #tpu.memory_space<vmem>>, vector<8x128xf32>,
      %c0_16 = arith.constant 0 : index
      %c0_17 = arith.constant 0 : index
      %46 = vector.load %arg8[%c0_16, %c0_17] : memref<8x128xf32, #tpu.memory_space<vmem>>, vector<8x128xf32>
      %47 = arith.addf %46, %30 : vector<8x128xf32>
      %c0_18 = arith.constant 0 : index
      %c0_19 = arith.constant 0 : index
      %48 = vector.load %arg8[%c0_18, %c0_19] : memref<8x128xf32, #tpu.memory_space<vmem>>, vector<8x128xf32>
      tpu.vector_store %arg8[%c0_18, %c0_19], %47 {strides = array<i32>} : memref<8x128xf32, #tpu.memory_space<vmem>>, vector<8x128xf32>,
    } else {
    }
    %c0_i32_6 = arith.constant 0 : i32
    %37 = arith.cmpi eq, %arg1, %c0_i32_6 : i32
    %38 = arith.extui %37 : i1 to i32
    %c0_i32_7 = arith.constant 0 : i32
    %39 = arith.cmpi ne, %38, %c0_i32_7 : i32
    scf.if %39 {
      %c0_8 = arith.constant 0 : index
      %c0_9 = arith.constant 0 : index
      %40 = vector.load %arg6[%c0_8, %c0_9] : memref<8x128xf32, #tpu.memory_space<vmem>>, vector<8x128xf32>
      %cst = arith.constant dense<0.000000e+00> : vector<8xf32>
      %41 = vector.multi_reduction <add>, %40, %cst [1] : vector<8x128xf32> to vector<8xf32>
      %42 = vector.shape_cast %41 : vector<8xf32> to vector<8x1xf32>
      %c0_10 = arith.constant 0 : index
      %c0_11 = arith.constant 0 : index
      %43 = vector.load %arg7[%c0_10, %c0_11] : memref<8x128xf32, #tpu.memory_space<vmem>>, vector<8x128xf32>
      %cst_12 = arith.constant dense<0.000000e+00> : vector<8xf32>
      %44 = vector.multi_reduction <add>, %43, %cst_12 [1] : vector<8x128xf32> to vector<8xf32>
      %45 = vector.shape_cast %44 : vector<8xf32> to vector<8x1xf32>
      %c0_13 = arith.constant 0 : index
      %c0_14 = arith.constant 0 : index
      %46 = vector.load %arg8[%c0_13, %c0_14] : memref<8x128xf32, #tpu.memory_space<vmem>>, vector<8x128xf32>
      %cst_15 = arith.constant dense<0.000000e+00> : vector<8xf32>
      %47 = vector.multi_reduction <add>, %46, %cst_15 [1] : vector<8x128xf32> to vector<8xf32>
      %48 = vector.shape_cast %47 : vector<8xf32> to vector<8x1xf32>
      %49 = math.sqrt %42 : vector<8x1xf32>
      %50 = math.sqrt %48 : vector<8x1xf32>
      %51 = arith.mulf %49, %50 : vector<8x1xf32>
      %cst_16 = arith.constant 9.99999996E-13 : f32
      %52 = vector.broadcast %cst_16 : f32 to vector<8x1xf32>
      %53 = arith.maximumf %51, %52 : vector<8x1xf32>
      %54 = arith.divf %45, %53 : vector<8x1xf32>
      %c0_17 = arith.constant 0 : index
      %c0_18 = arith.constant 0 : index
      %55 = vector.load %arg4[%c0_17, %c0_18] : memref<8x1xf32, #tpu.memory_space<vmem>>, vector<8x1xf32>
      %cst_19 = arith.constant 1.000000e+00 : f32
      %56 = vector.broadcast %cst_19 : f32 to vector<8x1xf32>
      %57 = arith.subf %56, %54 : vector<8x1xf32>
      %cst_20 = arith.constant 0.000000e+00 : f32
      %58 = vector.broadcast %cst_20 : f32 to vector<8x1xf32>
      %59 = arith.maximumf %57, %58 : vector<8x1xf32>
      %cst_21 = arith.constant 1.000000e+00 : f32
      %60 = vector.broadcast %cst_21 : f32 to vector<8x1xf32>
      %61 = arith.subf %60, %55 : vector<8x1xf32>
      %62 = arith.mulf %61, %54 : vector<8x1xf32>
      %63 = arith.mulf %62, %54 : vector<8x1xf32>
      %64 = arith.mulf %55, %59 : vector<8x1xf32>
      %65 = arith.mulf %64, %59 : vector<8x1xf32>
      %66 = arith.addf %63, %65 : vector<8x1xf32>
      %c8_i32 = arith.constant 8 : i32
      %67 = arith.muli %arg0, %c8_i32 : i32
      %68 = tpu.iota {dimensions = array<i32: 0>} : vector<8x1xi32>
      %69 = vector.broadcast %67 : i32 to vector<8x1xi32>
      %70 = arith.addi %69, %68 : vector<8x1xi32>
      %c4_i32 = arith.constant 4 : i32
      %71 = vector.broadcast %c4_i32 : i32 to vector<8x1xi32>
      %72 = arith.cmpi slt, %70, %71 : vector<8x1xi32>
      %cst_22 = arith.constant 0.000000e+00 : f32
      %73 = vector.broadcast %cst_22 : f32 to vector<8x1xf32>
      %74 = arith.select %72, %66, %73 : vector<8x1xi1>, vector<8x1xf32>
      %75 = vector.shape_cast %74 : vector<8x1xf32> to vector<1x8x1xf32>
      %cst_23 = arith.constant dense<0.000000e+00> : vector<1xf32>
      %76 = vector.multi_reduction <add>, %75, %cst_23 [1, 2] : vector<1x8x1xf32> to vector<1xf32>
      %77 = vector.shape_cast %76 : vector<1xf32> to vector<1x1x1xf32>
      %78 = vector.extract %77[0, 0, 0] : f32 from vector<1x1x1xf32>
      %79 = vector.broadcast %78 : f32 to vector<1x1xf32>
      %c0_24 = arith.constant 0 : index
      %c0_25 = arith.constant 0 : index
      %c0_26 = arith.constant 0 : index
      %80 = vector.load %arg5[%c0_24, %c0_25, %c0_26] : memref<1x1x1xf32, #tpu.memory_space<vmem>>, vector<1x1x1xf32>
      %81 = vector.shape_cast %80 : vector<1x1x1xf32> to vector<1x1xf32>
      %82 = vector.shape_cast %79 : vector<1x1xf32> to vector<1x1x1xf32>
      tpu.vector_store %arg5[%c0_24, %c0_25, %c0_26], %82 {strides = array<i32>} : memref<1x1x1xf32, #tpu.memory_space<vmem>>, vector<1x1x1xf32>,
    } else {
    }
    return
  }
  func.func @transform_0(%arg0: i32, %arg1: i32) -> (i32, i32) {
    %c0_i32 = arith.constant 0 : i32
    return %arg0, %arg1 : i32, i32
  }
  func.func @transform_1(%arg0: i32, %arg1: i32) -> (i32, i32) {
    %c0_i32 = arith.constant 0 : i32
    return %arg0, %arg1 : i32, i32
  }
  func.func @transform_2(%arg0: i32, %arg1: i32) -> (i32, i32) {
    %c0_i32 = arith.constant 0 : i32
    %c0_i32_0 = arith.constant 0 : i32
    return %arg0, %c0_i32 : i32, i32
  }
  func.func @transform_3(%arg0: i32, %arg1: i32) -> (i32, i32, i32) {
    %c0_i32 = arith.constant 0 : i32
    %c0_i32_0 = arith.constant 0 : i32
    %c0_i32_1 = arith.constant 0 : i32
    return %arg0, %c0_i32, %c0_i32_0 : i32, i32, i32
  }
}

</mosaic_0001>

<llo_original>
// kernel: contrastive_loss.1
$region0: #{contrastive_loss.1}
  #allocation0 [shape = 'u32[]', space=smem, size = 0x4, offset = 0x4, fixed_abs, tag = 'smem constant byte address 0x4 - core index']
  #allocation1 [shape = 'u32[144,128]{1,0:T(1,128)}', space=vmem, size = 0x12000, scoped, tag = 'internal scratch']
  #allocation2 [shape = 'f32[8,128]{1,0:T(8,128)}', space=vmem, size = 0x1000, scoped, tag = 'scratch operand']
  #allocation3 [shape = 'f32[8,128]{1,0:T(8,128)}', space=vmem, size = 0x1000, scoped, tag = 'scratch operand']
  #allocation4 [shape = 'f32[8,128]{1,0:T(8,128)}', space=vmem, size = 0x1000, scoped, tag = 'scratch operand']
  %s0 = inlined_call_operand.hbm [shape: f32[4,512], index: 0, kind: input, shape index: {}]
  %s1 = inlined_call_operand.hbm [shape: f32[4,512], index: 1, kind: input, shape index: {}]
  %s2 = inlined_call_operand.vmem [shape: f32[4,1], index: 2, kind: input, shape index: {}]
  %s3 = inlined_call_operand.hbm [shape: f32[1,1,1], index: 3, kind: output, shape index: {}]
  %s4 = sld [smem:[#allocation0]]
  $region42: #{contrastive_loss.1} parent=0
    _
  %s6 = ssub.s32 1, %s4
  %s7 = scalar_select 0, %s6, %s4
  $region1: #{contrastive_loss.1} parent=0
    #allocation5 [shape = 'u8[16384]{0}', space=vmem, size = 0x4000, scoped, tag = 'input window, operand 0, single buffered']
    #allocation6 [shape = 's32[1]{0}', space=sflag, size = 0x4, scoped, tag = 'scoped memory for contrastive_loss.1']
    #allocation7 [shape = 's32[1]{0}', space=sflag, size = 0x4, scoped, tag = 'scoped memory for contrastive_loss.1']
    #allocation8 [shape = 'u8[16384]{0}', space=vmem, size = 0x4000, scoped, tag = 'input window, operand 1, single buffered']
    #allocation9 [shape = 's32[1]{0}', space=sflag, size = 0x4, scoped, tag = 'scoped memory for contrastive_loss.1']
    #allocation10 [shape = 'u8[512]{0}', space=vmem, size = 0x400, scoped, tag = 'output window, operand 0, single buffered']
    %8 = vsyncpa [#allocation6], 0
    %9 = vsyncpa [#allocation9], 0
    %10 = vsyncpa [#allocation7], 0
    // Predicated region
    $region2: #{contrastive_loss.1} parent=1 // pred_check
      _
    $region3: #{contrastive_loss.1} parent=1 // pred_check_branch
      %12 = sbr.rel (0) target = $region5
    $region4: #{contrastive_loss.1} parent=1 // pred_region
      %s14 = ssub.s32 512, 256
      %15 = vsyncadd [#allocation6], %s14
      %s16 = sshll.u32 [#allocation5], 4
      %s17 = int_to_ptr.vmem [resolvable:$true] %s16
      %22 = dma.hbm_to_vmem [thread:$0]  %s0, 256, %s17, [#allocation6], 256, 256, 16
    $region5: #{contrastive_loss.1} parent=1 // pred_fallthru
      _
    // Predicated region
    $region6: #{contrastive_loss.1} parent=1 // pred_check
      _
    $region7: #{contrastive_loss.1} parent=1 // pred_check_branch
      %24 = sbr.rel (0) target = $region9
    $region8: #{contrastive_loss.1} parent=1 // pred_region
      %s26 = ssub.s32 512, 256
      %27 = vsyncadd [#allocation9], %s26
      %s28 = sshll.u32 [#allocation8], 4
      %s29 = int_to_ptr.vmem [resolvable:$true] %s28
      %34 = dma.hbm_to_vmem [thread:$0]  %s1, 256, %s29, [#allocation9], 256, 256, 16
    $region9: #{contrastive_loss.1} parent=1 // pred_fallthru
      _
    // Predicated region
    $region10: #{contrastive_loss.1} parent=1 // pred_check
      _
    $region11: #{contrastive_loss.1} parent=1 // pred_check_branch
      %36 = sbr.rel (0) target = $region13
    $region12: #{contrastive_loss.1} parent=1 // pred_region
      _
    $region13: #{contrastive_loss.1} parent=1 // pred_fallthru
      _
    // Predicated region
    $region14: #{contrastive_loss.1} parent=1 // pred_check
      _
    $region15: #{contrastive_loss.1} parent=1 // pred_check_branch
      %38 = sbr.rel (0) target = $region17
    $region16: #{contrastive_loss.1} parent=1 // pred_region
      %39 = dma.done [#allocation6], 512
    $region17: #{contrastive_loss.1} parent=1 // pred_fallthru
      _
    // Predicated region
    $region18: #{contrastive_loss.1} parent=1 // pred_check
      _
    $region19: #{contrastive_loss.1} parent=1 // pred_check_branch
      %41 = sbr.rel (0) target = $region21
    $region20: #{contrastive_loss.1} parent=1 // pred_region
      %42 = dma.done [#allocation9], 512
    $region21: #{contrastive_loss.1} parent=1 // pred_fallthru
      _
    %v43 = vld [vmem:[#allocation5] sm:$0xff]
    %v44 = vld [vmem:[#allocation5 + $0x8] sm:$0xff]
    %v45 = vld [vmem:[#allocation5 + $0x10] sm:$0xff]
    %v46 = vld [vmem:[#allocation5 + $0x18] sm:$0xff]
    %v47 = vld [vmem:[#allocation8] sm:$0xff]
    %v48 = vld [vmem:[#allocation8 + $0x8] sm:$0xff]
    %v49 = vld [vmem:[#allocation8 + $0x10] sm:$0xff]
    %v50 = vld [vmem:[#allocation8 + $0x18] sm:$0xff]
    %v51 = vmul.f32 %v43, %v43
    %v52 = vmul.f32 %v45, %v45
    %v53 = vmul.f32 %v43, %v47
    %v54 = vmul.f32 %v45, %v49
    %v55 = vmul.f32 %v47, %v47
    %v56 = vmul.f32 %v49, %v49
    %v59 = vrot.slane %v43, 4
    %v60 = vrot.slane %v45, 4
    %v63 = vmul.f32 %v59, %v59
    %v64 = vmul.f32 %v60, %v60
    %v65 = vadd.f32 %v51, %v63
    %v66 = vadd.f32 %v52, %v64
    %v69 = vrot.slane %v47, 4
    %v70 = vrot.slane %v49, 4
    %v73 = vmul.f32 %v59, %v69
    %v74 = vmul.f32 %v60, %v70
    %v75 = vadd.f32 %v53, %v73
    %v76 = vadd.f32 %v54, %v74
    %v77 = vmul.f32 %v69, %v69
    %v78 = vmul.f32 %v70, %v70
    %v79 = vadd.f32 %v55, %v77
    %v80 = vadd.f32 %v56, %v78
    %v81 = vmul.f32 %v44, %v44
    %v82 = vmul.f32 %v46, %v46
    %v83 = vadd.f32 %v65, %v81
    %v84 = vadd.f32 %v66, %v82
    %v85 = vmul.f32 %v44, %v48
    %v86 = vmul.f32 %v46, %v50
    %v87 = vadd.f32 %v75, %v85
    %v88 = vadd.f32 %v76, %v86
    %v89 = vmul.f32 %v48, %v48
    %v90 = vmul.f32 %v50, %v50
    %v91 = vadd.f32 %v79, %v89
    %v92 = vadd.f32 %v80, %v90
    %v95 = vrot.slane %v44, 4
    %v96 = vrot.slane %v46, 4
    %v99 = vmul.f32 %v95, %v95
    %v100 = vmul.f32 %v96, %v96
    %v101 = vadd.f32 %v83, %v99
    %v102 = vadd.f32 %v84, %v100
    %v105 = vrot.slane %v48, 4
    %v106 = vrot.slane %v50, 4
    %v109 = vmul.f32 %v95, %v105
    %v110 = vmul.f32 %v96, %v106
    %v111 = vadd.f32 %v87, %v109
    %v112 = vadd.f32 %v88, %v110
    %v113 = vmul.f32 %v105, %v105
    %v114 = vmul.f32 %v106, %v106
    %v115 = vadd.f32 %v91, %v113
    %v116 = vadd.f32 %v92, %v114
    %p117 = scmp.eq.s32.totalorder 0, 0
    // Predicated region
    $region22: #{contrastive_loss.1} parent=1 // pred_check
      %p118 = pneg %p117
    $region23: #{contrastive_loss.1} parent=1 // pred_check_branch
      %120 = sbr.rel (%p118) target = $region25
    $region24: #{contrastive_loss.1} parent=1 // pred_region
      %v123 = vcombine.low %v101, %v102
      %125 = vst [vmem:[#allocation2] sm:$0xff] %v123
      %v128 = vcombine.low %v111, %v112
      %130 = vst [vmem:[#allocation3] sm:$0xff] %v128
      %v133 = vcombine.low %v115, %v116
      %135 = vst [vmem:[#allocation4] sm:$0xff] %v133
    $region25: #{contrastive_loss.1} parent=1 // pred_fallthru
      _
    %p136 = scmp.ne.s32.totalorder 0, 0
    // Predicated region
    $region26: #{contrastive_loss.1} parent=1 // pred_check
      %p137 = pneg %p136
    $region27: #{contrastive_loss.1} parent=1 // pred_check_branch
      %139 = sbr.rel (%p137) target = $region29
    $region28: #{contrastive_loss.1} parent=1 // pred_region
      %v140 = vld [vmem:[#allocation2] sm:$0xff]
      %v143 = vcombine.low %v101, %v102
      %v145 = vadd.f32 %v140, %v143
      %146 = vst [vmem:[#allocation2] sm:$0xff] %v145
      %v147 = vld [vmem:[#allocation3] sm:$0xff]
      %v150 = vcombine.low %v111, %v112
      %v152 = vadd.f32 %v147, %v150
      %153 = vst [vmem:[#allocation3] sm:$0xff] %v152
      %v154 = vld [vmem:[#allocation4] sm:$0xff]
      %v157 = vcombine.low %v115, %v116
      %v159 = vadd.f32 %v154, %v157
      %160 = vst [vmem:[#allocation4] sm:$0xff] %v159
    $region29: #{contrastive_loss.1} parent=1 // pred_fallthru
      _
    // Predicated region
    $region30: #{contrastive_loss.1} parent=1 // pred_check
      %p161 = pneg %p117
    $region31: #{contrastive_loss.1} parent=1 // pred_check_branch
      %163 = sbr.rel (%p161) target = $region33
    $region32: #{contrastive_loss.1} parent=1 // pred_region
      %v164 = vld [vmem:[#allocation2] sm:$0xff]
      %165 = vadd.xlane.f32.xlu0 %v164
      %v166 = vpop.xlane.xlu0 %165
      %v167 = vld [vmem:[#allocation3] sm:$0xff]
      %168 = vadd.xlane.f32.xlu0 %v167
      %v169 = vpop.xlane.xlu0 %168
      %v170 = vld [vmem:[#allocation4] sm:$0xff]
      %171 = vadd.xlane.f32.xlu0 %v170
      %v172 = vpop.xlane.xlu0 %171
      %v173 = vrsqrt.pop %v166
      %v174 = vmul.f32 %v166, %v173
      %vm175 = vcmp.eq.f32.partialorder %v166, inf
      %v176 = vsel %vm175, %v166, %v174
      %vm177 = vcmp.eq.f32.partialorder %v166, 0.0
      %v178 = vand.u32 %v166, 2147483648
      %v179 = vsel %vm177, %v178, %v176
      %v180 = vrsqrt.pop %v172
      %v181 = vmul.f32 %v172, %v180
      %vm182 = vcmp.eq.f32.partialorder %v172, inf
      %v183 = vsel %vm182, %v172, %v181
      %vm184 = vcmp.eq.f32.partialorder %v172, 0.0
      %v185 = vand.u32 %v172, 2147483648
      %v186 = vsel %vm184, %v185, %v183
      %v187 = vmul.f32 %v179, %v186
      %v188 = vmax.f32 %v187, 1e-12
      %v189 = vrcp.pop %v188
      %v190 = vmul.f32 %v169, %v189
      %v191 = vld [vmem:[%s2] sm:$0xff]
      %v192 = vsub.f32 1.0, %v190
      %v193 = vmax.f32 %v192, 0.0
      %v194 = vsub.f32 1.0, %v191
      %v195 = vmul.f32 %v194, %v190
      %v196 = vmul.f32 %v195, %v190
      %v197 = vmul.f32 %v191, %v193
      %v198 = vmul.f32 %v197, %v193
      %v199 = vadd.f32 %v196, %v198
      %s200 = smul.u32 0, 8
      %v201 = vlaneseq
      %v202 = vshrl.u32 %v201, 7
      %v203 = vstv %s200
      %v204 = vadd.s32 %v203, %v202
      %vm205 = vcmp.lt.s32.totalorder %v204, 4
      %v206 = vsel %vm205, %v199, 0.0
      %vm207 = vcmask 7168
      %v208 = vsel %vm207, %v206, 0.0
      %209 = vadd.xlane.f32.xlu0 %v208
      %v210 = vpop.xlane.xlu0 %209
      %v211 = vrot.slane %v210, 4
      %v212 = vadd.f32 %v210, %v211
      %v213 = vrot.slane %v212, 2
      %v214 = vadd.f32 %v212, %v213
      %v215 = vrot.slane %v214, 1
      %v216 = vadd.f32 %v214, %v215
      %s217 = vtos %v216
      %v218 = vstv %s217
      %vm219 = vcmask 0
      %220 = vst.msk [vmem:[#allocation10] sm:$0x1] %vm219, %v218
    $region33: #{contrastive_loss.1} parent=1 // pred_fallthru
      _
    // Predicated region
    $region34: #{contrastive_loss.1} parent=1 // pred_check
      _
    $region35: #{contrastive_loss.1} parent=1 // pred_check_branch
      %222 = sbr.rel (0) target = $region37
    $region36: #{contrastive_loss.1} parent=1 // pred_region
      %s224 = ssub.s32 16, 16
      %225 = vsyncadd [#allocation7], %s224
      %s227 = sshll.u32 [#allocation10], 4
      %s228 = int_to_ptr.vmem [resolvable:$true] %s227
      %230 = dma.vmem_to_hbm [thread:$0]  %s228, 16, %s3, [#allocation7]
    $region37: #{contrastive_loss.1} parent=1 // pred_fallthru
      _
    // Predicated region
    $region38: #{contrastive_loss.1} parent=1 // pred_check
      _
    $region39: #{contrastive_loss.1} parent=1 // pred_check_branch
      %232 = sbr.rel (0) target = $region41
    $region40: #{contrastive_loss.1} parent=1 // pred_region
      %233 = dma.done [#allocation7], 16
    $region41: #{contrastive_loss.1} parent=1 // pred_fallthru
      _
    %234 = vsyncpa [#allocation6], 1
    %235 = vsyncpa [#allocation9], 1
    %236 = vsyncpa [#allocation7], 1

</llo_original>
